<compile_context>
chip_gen: v6e
topology: v6e:2x2x1
jax: 0.10.0
libtpu: 0.0.40
codegen_flags: <defaults>
</compile_context>

<pallas_src>
import functools

import jax
import jax.numpy as jnp
from jax.experimental import pallas as pl
from jax.experimental.pallas import tpu as pltpu


def vae_kernel(x_ref, w_ref, b_ref, eps_ref, z_ref, kl_ref, *, dim_vae):
    x = x_ref[...]                                          # (tm, dim_input)
    # One fused MXU pass: y = x @ [W_mu | W_lv] + [b_mu | b_lv]
    y = jnp.dot(x, w_ref[...], preferred_element_type=jnp.float32)
    y = y + b_ref[...]                                      # (tm, 2*dim_vae)
    mu = y[:, :dim_vae]                                     # lane-aligned slices
    logvar = y[:, dim_vae:]
    # sigma = exp(logvar/2); reuse it for exp(logvar) = sigma*sigma (1 EUP op).
    sigma = jnp.exp(logvar * 0.5)
    exp_logvar = sigma * sigma
    z = mu + sigma * eps_ref[...]
    kl = -0.5 * (1.0 + logvar - mu * mu - exp_logvar)
    z_ref[...] = z.astype(z_ref.dtype)
    kl_ref[...] = kl.astype(kl_ref.dtype)


def _round_up(n, m):
    return ((n + m - 1) // m) * m


def vae_forward(x, w_mu, b_mu, w_lv, b_lv, eps, *, tm=256):
    """z_sampled, kl_loss = VAE(x) with weights stored as (dim_input, dim_vae)."""
    B, dim_input = x.shape
    dim_vae = w_mu.shape[1]

    # Fuse the two Linear layers into a single (dim_input, 2*dim_vae) matmul.
    w = jnp.concatenate([w_mu, w_lv], axis=1)                       # (K, 2N)
    b = jnp.concatenate([b_mu, b_lv], axis=0).reshape(1, 2 * dim_vae)

    # Batch tile: as large as requested, shrunk (8-aligned) for small batches;
    # pad B up to a multiple of tm so any caller batch size works.
    tm = max(8, min(tm, _round_up(B, 8)))
    B_pad = _round_up(B, tm)
    if B_pad != B:
        x = jnp.pad(x, ((0, B_pad - B), (0, 0)))
        eps = jnp.pad(eps, ((0, B_pad - B), (0, 0)))

    grid = (B_pad // tm,)
    kernel = functools.partial(vae_kernel, dim_vae=dim_vae)

    out_shapes = (
        jax.ShapeDtypeStruct((B_pad, dim_vae), jnp.float32),   # z_sampled
        jax.ShapeDtypeStruct((B_pad, dim_vae), jnp.float32),   # kl_loss
    )
    in_specs = [
        pl.BlockSpec((tm, dim_input), lambda i: (i, 0)),           # x tile
        pl.BlockSpec((dim_input, 2 * dim_vae), lambda i: (0, 0)),  # fused W
        pl.BlockSpec((1, 2 * dim_vae), lambda i: (0, 0)),          # fused b
        pl.BlockSpec((tm, dim_vae), lambda i: (i, 0)),             # eps tile
    ]
    out_specs = (
        pl.BlockSpec((tm, dim_vae), lambda i: (i, 0)),
        pl.BlockSpec((tm, dim_vae), lambda i: (i, 0)),
    )

    z, kl = pl.pallas_call(
        kernel,
        out_shape=out_shapes,
        grid_spec=pltpu.PrefetchScalarGridSpec(
            num_scalar_prefetch=0,
            grid=grid,
            in_specs=in_specs,
            out_specs=out_specs,
        ),
        compiler_params=pltpu.CompilerParams(
            dimension_semantics=("parallel",),   # lets v7x shard batch over 2 TCs
            vmem_limit_bytes=64 << 20,           # headroom for large tm sweeps
        ),
    )(x, w, b, eps)

    if B_pad != B:
        z, kl = z[:B], kl[:B]
    return z, kl


def reference(x, w_mu, b_mu, w_lv, b_lv, eps):
    mu = x @ w_mu + b_mu
    logvar = x @ w_lv + b_lv
    sigma = jnp.exp(logvar / 2)
    z = mu + sigma * eps
    kl = -(1 + logvar - mu * mu - jnp.exp(logvar)) / 2
    return z, kl


if __name__ == "__main__":
    dim_input, dim_vae = 64, 128

    key = jax.random.PRNGKey(0)
    kx, kwm, kbm, kwl, kbl, keps, kx2, keps2 = jax.random.split(key, 8)

    # Deterministic synthetic parameters (shapes match nn.Linear, stored
    # transposed so the kernel computes x @ W + b).
    bound = 1.0 / (dim_input ** 0.5)
    w_mu = jax.random.uniform(kwm, (dim_input, dim_vae), jnp.float32, -bound, bound)
    b_mu = jax.random.uniform(kbm, (dim_vae,), jnp.float32, -bound, bound)
    w_lv = jax.random.uniform(kwl, (dim_input, dim_vae), jnp.float32, -bound, bound)
    b_lv = jax.random.uniform(kbl, (dim_vae,), jnp.float32, -bound, bound)

    # Test 1: tile-aligned batch.
    B = 16
    x = jax.random.normal(kx, (B, dim_input), dtype=jnp.float32)
    eps = jax.random.normal(keps, (B, dim_vae), dtype=jnp.float32)
    z, kl = vae_forward(x, w_mu, b_mu, w_lv, b_lv, eps)
    jax.block_until_ready((z, kl))
    z_ref, kl_ref = reference(x, w_mu, b_mu, w_lv, b_lv, eps)
    assert jnp.allclose(z, z_ref, atol=1e-5, rtol=1e-5)
    assert jnp.allclose(kl, kl_ref, atol=1e-5, rtol=1e-5)

    # Test 2: ragged batch (exercises the padding path removing B % tm asserts).
    B2 = 13
    x2 = jax.random.normal(kx2, (B2, dim_input), dtype=jnp.float32)
    eps2 = jax.random.normal(keps2, (B2, dim_vae), dtype=jnp.float32)
    z2, kl2 = vae_forward(x2, w_mu, b_mu, w_lv, b_lv, eps2)
    jax.block_until_ready((z2, kl2))
    z2_ref, kl2_ref = reference(x2, w_mu, b_mu, w_lv, b_lv, eps2)
    assert z2.shape == (B2, dim_vae) and kl2.shape == (B2, dim_vae)
    assert jnp.allclose(z2, z2_ref, atol=1e-5, rtol=1e-5)
    assert jnp.allclose(kl2, kl2_ref, atol=1e-5, rtol=1e-5)

    print("KERNEL_OK")
</pallas_src>

<mosaic_0001>
module attributes {stable_mosaic.version = 11 : i64} {
  func.func @vae_kernel(%arg0: i32, %arg1: memref<16x64xf32, #tpu.memory_space<vmem>>, %arg2: memref<64x256xf32, #tpu.memory_space<vmem>>, %arg3: memref<1x256xf32, #tpu.memory_space<vmem>>, %arg4: memref<16x128xf32, #tpu.memory_space<vmem>>, %arg5: memref<16x128xf32, #tpu.memory_space<vmem>>, %arg6: memref<16x128xf32, #tpu.memory_space<vmem>>) attributes {dimension_semantics = [#tpu.dimension_semantics<parallel>], iteration_bounds = array<i64: 1>, scalar_prefetch = 0 : i64, scratch_operands = 0 : i64, tpu.core_type = #tpu.core_type<tc>, window_params = [{transform_indices = @transform_0, window_bounds = array<i64: 16, 64>}, {pipeline_mode = #tpu.pipeline_mode<synchronous>, transform_indices = @transform_1, window_bounds = array<i64: 64, 256>}, {pipeline_mode = #tpu.pipeline_mode<synchronous>, transform_indices = @transform_2, window_bounds = array<i64: 1, 256>}, {transform_indices = @transform_3, window_bounds = array<i64: 16, 128>}, {transform_indices = @transform_4, window_bounds = array<i64: 16, 128>}, {transform_indices = @transform_5, window_bounds = array<i64: 16, 128>}]} {
    %c0 = arith.constant 0 : index
    %c0_0 = arith.constant 0 : index
    %0 = vector.load %arg1[%c0, %c0_0] : memref<16x64xf32, #tpu.memory_space<vmem>>, vector<16x64xf32>
    %c0_1 = arith.constant 0 : index
    %c0_2 = arith.constant 0 : index
    %1 = vector.load %arg2[%c0_1, %c0_2] : memref<64x256xf32, #tpu.memory_space<vmem>>, vector<64x256xf32>
    %cst = arith.constant dense<0.000000e+00> : vector<16x256xf32>
    %2 = tpu.matmul %0, %1, %cst {dimension_numbers = #tpu.dot_dimension_numbers<[1], [0], [0], [1], [0, 0, 1, 1], [], []>} : vector<16x64xf32>, vector<64x256xf32>, vector<16x256xf32> -> vector<16x256xf32>
    %c0_3 = arith.constant 0 : index
    %c0_4 = arith.constant 0 : index
    %3 = vector.load %arg3[%c0_3, %c0_4] : memref<1x256xf32, #tpu.memory_space<vmem>>, vector<1x256xf32>
    %4 = vector.broadcast %3 : vector<1x256xf32> to vector<16x256xf32>
    %5 = arith.addf %2, %4 : vector<16x256xf32>
    %6 = vector.extract_strided_slice %5 {offsets = [0, 0], sizes = [16, 128], strides = [1, 1]} : vector<16x256xf32> to vector<16x128xf32>
    %7 = vector.extract_strided_slice %5 {offsets = [0, 128], sizes = [16, 128], strides = [1, 1]} : vector<16x256xf32> to vector<16x128xf32>
    %cst_5 = arith.constant 5.000000e-01 : f32
    %8 = vector.broadcast %cst_5 : f32 to vector<16x128xf32>
    %9 = arith.mulf %7, %8 : vector<16x128xf32>
    %10 = math.exp %9 : vector<16x128xf32>
    %11 = arith.mulf %10, %10 : vector<16x128xf32>
    %c0_6 = arith.constant 0 : index
    %c0_7 = arith.constant 0 : index
    %12 = vector.load %arg4[%c0_6, %c0_7] : memref<16x128xf32, #tpu.memory_space<vmem>>, vector<16x128xf32>
    %13 = arith.mulf %10, %12 : vector<16x128xf32>
    %14 = arith.addf %6, %13 : vector<16x128xf32>
    %cst_8 = arith.constant 1.000000e+00 : f32
    %15 = vector.broadcast %cst_8 : f32 to vector<16x128xf32>
    %16 = arith.addf %15, %7 : vector<16x128xf32>
    %17 = arith.mulf %6, %6 : vector<16x128xf32>
    %18 = arith.subf %16, %17 : vector<16x128xf32>
    %19 = arith.subf %18, %11 : vector<16x128xf32>
    %cst_9 = arith.constant -5.000000e-01 : f32
    %20 = vector.broadcast %cst_9 : f32 to vector<16x128xf32>
    %21 = arith.mulf %20, %19 : vector<16x128xf32>
    %c0_10 = arith.constant 0 : index
    %c0_11 = arith.constant 0 : index
    %22 = vector.load %arg5[%c0_10, %c0_11] : memref<16x128xf32, #tpu.memory_space<vmem>>, vector<16x128xf32>
    tpu.vector_store %arg5[%c0_10, %c0_11], %14 {strides = array<i32>} : memref<16x128xf32, #tpu.memory_space<vmem>>, vector<16x128xf32>,
    %c0_12 = arith.constant 0 : index
    %c0_13 = arith.constant 0 : index
    %23 = vector.load %arg6[%c0_12, %c0_13] : memref<16x128xf32, #tpu.memory_space<vmem>>, vector<16x128xf32>
    tpu.vector_store %arg6[%c0_12, %c0_13], %21 {strides = array<i32>} : memref<16x128xf32, #tpu.memory_space<vmem>>, vector<16x128xf32>,
    return
  }
  func.func @transform_0(%arg0: i32) -> (i32, i32) {
    %c0_i32 = arith.constant 0 : i32
    %c0_i32_0 = arith.constant 0 : i32
    return %arg0, %c0_i32 : i32, i32
  }
  func.func @transform_1(%arg0: i32) -> (i32, i32) {
    %c0_i32 = arith.constant 0 : i32
    %c0_i32_0 = arith.constant 0 : i32
    %c0_i32_1 = arith.constant 0 : i32
    return %c0_i32, %c0_i32_0 : i32, i32
  }
  func.func @transform_2(%arg0: i32) -> (i32, i32) {
    %c0_i32 = arith.constant 0 : i32
    %c0_i32_0 = arith.constant 0 : i32
    %c0_i32_1 = arith.constant 0 : i32
    return %c0_i32, %c0_i32_0 : i32, i32
  }
  func.func @transform_3(%arg0: i32) -> (i32, i32) {
    %c0_i32 = arith.constant 0 : i32
    %c0_i32_0 = arith.constant 0 : i32
    return %arg0, %c0_i32 : i32, i32
  }
  func.func @transform_4(%arg0: i32) -> (i32, i32) {
    %c0_i32 = arith.constant 0 : i32
    %c0_i32_0 = arith.constant 0 : i32
    return %arg0, %c0_i32 : i32, i32
  }
  func.func @transform_5(%arg0: i32) -> (i32, i32) {
    %c0_i32 = arith.constant 0 : i32
    %c0_i32_0 = arith.constant 0 : i32
    return %arg0, %c0_i32 : i32, i32
  }
}

</mosaic_0001>

<llo_original>
// kernel: tpu_custom_call.1
$region0: #{tpu_custom_call.1}
  #allocation0 [shape = 'u32[]', space=smem, size = 0x4, offset = 0x4, fixed_abs, tag = 'smem constant byte address 0x4 - core index']
  #allocation1 [shape = 'u32[144,128]{1,0:T(1,128)}', space=vmem, size = 0x12000, scoped, tag = 'internal scratch']
  %s0 = inlined_call_operand.hbm [shape: f32[16,64], index: 0, kind: input, shape index: {}]
  %s1 = inlined_call_operand.hbm [shape: f32[64,256], index: 1, kind: input, shape index: {}]
  %s2 = inlined_call_operand.vmem [shape: f32[1,256], index: 2, kind: input, shape index: {}]
  %s3 = inlined_call_operand.hbm [shape: f32[16,128], index: 3, kind: input, shape index: {}]
  %s4 = inlined_call_operand.hbm [shape: f32[16,128], index: 4, kind: output, shape index: {0}]
  %s5 = inlined_call_operand.hbm [shape: f32[16,128], index: 5, kind: output, shape index: {1}]
  %6 = xla_tuple %s4, %s5
  %s7 = sld [smem:[#allocation0]]
  $region46: #{tpu_custom_call.1} parent=0
    _
  %s9 = ssub.s32 1, %s7
  %s10 = scalar_select 0, %s9, %s7
  $region1: #{tpu_custom_call.1} parent=0
    #allocation2 [shape = 'u8[8192]{0}', space=vmem, size = 0x2000, scoped, tag = 'input window, operand 0, single buffered']
    #allocation3 [shape = 's32[1]{0}', space=sflag, size = 0x4, scoped, tag = 'scoped memory for tpu_custom_call.1']
    #allocation4 [shape = 's32[1]{0}', space=sflag, size = 0x4, scoped, tag = 'scoped memory for tpu_custom_call.1']
    #allocation5 [shape = 'u8[65536]{0}', space=vmem, size = 0x10000, scoped, tag = 'input window, operand 1, single buffered']
    #allocation6 [shape = 's32[1]{0}', space=sflag, size = 0x4, scoped, tag = 'scoped memory for tpu_custom_call.1']
    #allocation7 [shape = 'u8[8192]{0}', space=vmem, size = 0x2000, scoped, tag = 'input window, operand 3, single buffered']
    #allocation8 [shape = 'u8[8192]{0}', space=vmem, size = 0x2000, scoped, tag = 'output window, operand 0, single buffered']
    #allocation9 [shape = 'u8[8192]{0}', space=vmem, size = 0x2000, scoped, tag = 'output window, operand 1, single buffered']
    #allocation10 [shape = 's32[1]{0}', space=sflag, size = 0x4, scoped, tag = 'scoped memory for tpu_custom_call.1']
    %11 = vsyncpa [#allocation3], 0
    %12 = vsyncpa [#allocation6], 0
    %13 = vsyncpa [#allocation4], 0
    %14 = vsyncpa [#allocation10], 0
    // Predicated region
    $region2: #{tpu_custom_call.1} parent=1 // pred_check
      _
    $region3: #{tpu_custom_call.1} parent=1 // pred_check_branch
      %16 = sbr.rel (0) target = $region5
    $region4: #{tpu_custom_call.1} parent=1 // pred_region
      %s18 = ssub.s32 256, 256
      %19 = vsyncadd [#allocation3], %s18
      %s20 = sshll.u32 [#allocation2], 4
      %s21 = int_to_ptr.vmem [resolvable:$true] %s20
      %26 = dma.hbm_to_vmem [thread:$0]  %s0, 256, %s21, [#allocation3], 128, 128, 8
    $region5: #{tpu_custom_call.1} parent=1 // pred_fallthru
      _
    // Predicated region
    $region6: #{tpu_custom_call.1} parent=1 // pred_check
      _
    $region7: #{tpu_custom_call.1} parent=1 // pred_check_branch
      %28 = sbr.rel (0) target = $region9
    $region8: #{tpu_custom_call.1} parent=1 // pred_region
      %s30 = ssub.s32 2048, 2048
      %31 = vsyncadd [#allocation6], %s30
      %s32 = sshll.u32 [#allocation5], 4
      %s33 = int_to_ptr.vmem [resolvable:$true] %s32
      %38 = dma.hbm_to_vmem [thread:$0]  %s1, 2048, %s33, [#allocation6], 256, 256, 16
    $region9: #{tpu_custom_call.1} parent=1 // pred_fallthru
      _
    // Predicated region
    $region10: #{tpu_custom_call.1} parent=1 // pred_check
      _
    $region11: #{tpu_custom_call.1} parent=1 // pred_check_branch
      %40 = sbr.rel (0) target = $region13
    $region12: #{tpu_custom_call.1} parent=1 // pred_region
      _
    $region13: #{tpu_custom_call.1} parent=1 // pred_fallthru
      _
    // Predicated region
    $region14: #{tpu_custom_call.1} parent=1 // pred_check
      _
    $region15: #{tpu_custom_call.1} parent=1 // pred_check_branch
      %42 = sbr.rel (0) target = $region17
    $region16: #{tpu_custom_call.1} parent=1 // pred_region
      %s44 = ssub.s32 256, 256
      %45 = vsyncadd [#allocation6], %s44
      %s46 = sshll.u32 [#allocation7], 4
      %s47 = int_to_ptr.vmem [resolvable:$true] %s46
      %52 = dma.hbm_to_vmem [thread:$0]  %s3, 256, %s47, [#allocation6], 128, 128, 8
    $region17: #{tpu_custom_call.1} parent=1 // pred_fallthru
      _
    // Predicated region
    $region18: #{tpu_custom_call.1} parent=1 // pred_check
      _
    $region19: #{tpu_custom_call.1} parent=1 // pred_check_branch
      %54 = sbr.rel (0) target = $region21
    $region20: #{tpu_custom_call.1} parent=1 // pred_region
      %55 = dma.done [#allocation3], 256
    $region21: #{tpu_custom_call.1} parent=1 // pred_fallthru
      _
    // Predicated region
    $region22: #{tpu_custom_call.1} parent=1 // pred_check
      _
    $region23: #{tpu_custom_call.1} parent=1 // pred_check_branch
      %57 = sbr.rel (0) target = $region25
    $region24: #{tpu_custom_call.1} parent=1 // pred_region
      %58 = dma.done [#allocation6], 2048
    $region25: #{tpu_custom_call.1} parent=1 // pred_fallthru
      _
    // Predicated region
    $region26: #{tpu_custom_call.1} parent=1 // pred_check
      _
    $region27: #{tpu_custom_call.1} parent=1 // pred_check_branch
      %60 = sbr.rel (0) target = $region29
    $region28: #{tpu_custom_call.1} parent=1 // pred_region
      %61 = dma.done [#allocation6], 256
    $region29: #{tpu_custom_call.1} parent=1 // pred_fallthru
      _
    %v62 = vld [vmem:[#allocation2] sm:$0xff]
    %v63 = vld [vmem:[#allocation2 + $0x8] sm:$0xff]
    %v64 = vld [vmem:[#allocation5] sm:$0xff]
    %v65 = vld [vmem:[#allocation5 + $0x8] sm:$0xff]
    %v66 = vld [vmem:[#allocation5 + $0x10] sm:$0xff]
    %v67 = vld [vmem:[#allocation5 + $0x18] sm:$0xff]
    %v68 = vld [vmem:[#allocation5 + $0x20] sm:$0xff]
    %v69 = vld [vmem:[#allocation5 + $0x28] sm:$0xff]
    %v70 = vld [vmem:[#allocation5 + $0x30] sm:$0xff]
    %v71 = vld [vmem:[#allocation5 + $0x38] sm:$0xff]
    %v72 = vld [vmem:[#allocation5 + $0x40] sm:$0xff]
    %v73 = vld [vmem:[#allocation5 + $0x48] sm:$0xff]
    %v74 = vld [vmem:[#allocation5 + $0x50] sm:$0xff]
    %v75 = vld [vmem:[#allocation5 + $0x58] sm:$0xff]
    %v76 = vld [vmem:[#allocation5 + $0x60] sm:$0xff]
    %v77 = vld [vmem:[#allocation5 + $0x68] sm:$0xff]
    %v78 = vld [vmem:[#allocation5 + $0x70] sm:$0xff]
    %v79 = vld [vmem:[#allocation5 + $0x78] sm:$0xff]
    %v80 = vld [vmem:[%s2] sm:$0x3]
    %v82 = vlaneseq
    %v83 = vshrl.u32 %v82, 7
    %v84 = vsub.s32 0, %v83
    %v85 = vrot.slane %v80, %v84
    %v86 = vlaneseq
    %v87 = vshrl.u32 %v86, 7
    %v88 = vsub.s32 1, %v87
    %v89 = vrot.slane %v80, %v88
    %vm92 = vcmask 523264
    %v94 = vsel %vm92, %v62, 0
    %v97 = vsel %vm92, %v63, 0
    %99 = vmatprep.subr.mxu0 0.0
    %100 = vmatpush1.msra.mxu0 0.0
    %101 = vmatprep.subr.mxu0 0.0
    %102 = vmatpush1.msra.mxu0 0.0
    %103 = vmatprep.subr.mxu0 0.0
    %104 = vmatpush1.msra.mxu0 0.0
    %105 = vmatprep.subr.mxu0 0.0
    %106 = vmatpush1.msra.mxu0 0.0
    %107 = vmatprep.subr.mxu0 0.0
    %108 = vmatpush1.msra.mxu0 0.0
    %109 = vmatprep.subr.mxu0 0.0
    %110 = vmatpush1.msra.mxu0 0.0
    %111 = vmatprep.subr.mxu0 0.0
    %112 = vmatpush1.msra.mxu0 0.0
    %113 = vmatprep.subr.mxu0 0.0
    %114 = vmatpush1.msra.mxu0 0.0
    %115 = vmatprep.subr.mxu0 %v79
    %116 = vmatpush1.msra.mxu0 %v78
    %117 = vmatprep.subr.mxu0 %v77
    %118 = vmatpush1.msra.mxu0 %v76
    %119 = vmatprep.subr.mxu0 %v75
    %120 = vmatpush1.msra.mxu0 %v74
    %121 = vmatprep.subr.mxu0 %v73
    %122 = vmatpush1.msra.mxu0 %v72
    %123 = vmatprep.subr.mxu0 %v71
    %124 = vmatpush1.msra.mxu0 %v70
    %125 = vmatprep.subr.mxu0 %v69
    %126 = vmatpush1.msra.mxu0 %v68
    %127 = vmatprep.subr.mxu0 %v67
    %128 = vmatpush1.msra.mxu0 %v66
    %129 = vmatprep.subr.mxu0 %v65
    %130 = vmatpush1.msra.mxu0 %v64
    %131 = vmatprep.subr.mxu0 0.0
    %132 = vmatpush2.msra.mxu0 0.0
    %133 = vmatprep.subr.mxu0 0.0
    %134 = vmatpush2.msra.mxu0 0.0
    %135 = vmatprep.subr.mxu0 0.0
    %136 = vmatpush2.msra.mxu0 0.0
    %137 = vmatprep.subr.mxu0 0.0
    %138 = vmatpush2.msra.mxu0 0.0
    %139 = vmatprep.subr.mxu0 0.0
    %140 = vmatpush2.msra.mxu0 0.0
    %141 = vmatprep.subr.mxu0 0.0
    %142 = vmatpush2.msra.mxu0 0.0
    %143 = vmatprep.subr.mxu0 0.0
    %144 = vmatpush2.msra.mxu0 0.0
    %145 = vmatprep.subr.mxu0 0.0
    %146 = vmatpush2.msra.mxu0 0.0
    %147 = vmatprep.subr.mxu0 0.0
    %148 = vmatpush2.msra.mxu0 0.0
    %149 = vmatprep.subr.mxu0 0.0
    %150 = vmatpush2.msra.mxu0 0.0
    %151 = vmatprep.subr.mxu0 0.0
    %152 = vmatpush2.msra.mxu0 0.0
    %153 = vmatprep.subr.mxu0 0.0
    %154 = vmatpush2.msra.mxu0 0.0
    %155 = vmatprep.subr.mxu0 0.0
    %156 = vmatpush2.msra.mxu0 0.0
    %157 = vmatprep.subr.mxu0 0.0
    %158 = vmatpush2.msra.mxu0 0.0
    %159 = vmatprep.subr.mxu0 0.0
    %160 = vmatpush2.msra.mxu0 0.0
    %161 = vmatprep.subr.mxu0 0.0
    %162 = vmatpush2.msra.mxu0 0.0
    %163 = vmatprep.mubr.f32.mxu0 0.0
    %164 = vmatmul.mubr.f32.gmra.mxu0 %v94
    %v165 = vpop.f32.mrf.mxu0
    %v166 = vadd.f32 %v85, %v165
    %v167 = vpop.f32.mrf.mxu0
    %v168 = vadd.f32 %v89, %v167
    %169 = vmatprep.mubr.f32.mxu0 0.0
    %170 = vmatmul.mubr.f32.gmra.mxu0 %v97
    %v171 = vpop.f32.mrf.mxu0
    %v172 = vadd.f32 %v85, %v171
    %v173 = vpop.f32.mrf.mxu0
    %v174 = vadd.f32 %v89, %v173
    %175 = vdwg.mxu0
    %v176 = vmul.f32 %v168, 0.5
    %v177 = vmul.f32 %v174, 0.5
    %v178 = vmul.f32 %v176, 1.442695
    %v179 = vpow.pop %v178
    %v180 = vmul.f32 %v177, 1.442695
    %v181 = vpow.pop %v180
    %v182 = vmul.f32 %v179, %v179
    %v183 = vmul.f32 %v181, %v181
    %v184 = vld [vmem:[#allocation7] sm:$0xff]
    %v185 = vld [vmem:[#allocation7 + $0x8] sm:$0xff]
    %v186 = vmul.f32 %v179, %v184
    %v187 = vmul.f32 %v181, %v185
    %v188 = vadd.f32 %v166, %v186
    %v189 = vadd.f32 %v172, %v187
    %v190 = vadd.f32 %v168, 1.0
    %v191 = vadd.f32 %v174, 1.0
    %v192 = vmul.f32 %v166, %v166
    %v193 = vmul.f32 %v172, %v172
    %v194 = vsub.f32 %v190, %v192
    %v195 = vsub.f32 %v191, %v193
    %v196 = vsub.f32 %v194, %v182
    %v197 = vsub.f32 %v195, %v183
    %v198 = vmul.f32 %v196, -0.5
    %v199 = vmul.f32 %v197, -0.5
    %200 = vst [vmem:[#allocation8] sm:$0xff] %v188
    %201 = vst [vmem:[#allocation8 + $0x8] sm:$0xff] %v189
    %202 = vst [vmem:[#allocation9] sm:$0xff] %v198
    %203 = vst [vmem:[#allocation9 + $0x8] sm:$0xff] %v199
    // Predicated region
    $region30: #{tpu_custom_call.1} parent=1 // pred_check
      _
    $region31: #{tpu_custom_call.1} parent=1 // pred_check_branch
      %205 = sbr.rel (0) target = $region33
    $region32: #{tpu_custom_call.1} parent=1 // pred_region
      %s207 = ssub.s32 256, 256
      %208 = vsyncadd [#allocation4], %s207
      %s209 = sshll.u32 [#allocation8], 4
      %s210 = int_to_ptr.vmem [resolvable:$true] %s209
      %215 = dma.vmem_to_hbm [thread:$0]  %s210, 256, %s4, [#allocation4], 128, 128, 8
    $region33: #{tpu_custom_call.1} parent=1 // pred_fallthru
      _
    // Predicated region
    $region34: #{tpu_custom_call.1} parent=1 // pred_check
      _
    $region35: #{tpu_custom_call.1} parent=1 // pred_check_branch
      %217 = sbr.rel (0) target = $region37
    $region36: #{tpu_custom_call.1} parent=1 // pred_region
      %s219 = ssub.s32 256, 256
      %220 = vsyncadd [#allocation10], %s219
      %s221 = sshll.u32 [#allocation9], 4
      %s222 = int_to_ptr.vmem [resolvable:$true] %s221
      %227 = dma.vmem_to_hbm [thread:$0]  %s222, 256, %s5, [#allocation10], 128, 128, 8
    $region37: #{tpu_custom_call.1} parent=1 // pred_fallthru
      _
    // Predicated region
    $region38: #{tpu_custom_call.1} parent=1 // pred_check
      _
    $region39: #{tpu_custom_call.1} parent=1 // pred_check_branch
      %229 = sbr.rel (0) target = $region41
    $region40: #{tpu_custom_call.1} parent=1 // pred_region
      %230 = dma.done [#allocation4], 256
    $region41: #{tpu_custom_call.1} parent=1 // pred_fallthru
      _
    // Predicated region
    $region42: #{tpu_custom_call.1} parent=1 // pred_check
      _
    $region43: #{tpu_custom_call.1} parent=1 // pred_check_branch
      %232 = sbr.rel (0) target = $region45
    $region44: #{tpu_custom_call.1} parent=1 // pred_region
      %233 = dma.done [#allocation10], 256
    $region45: #{tpu_custom_call.1} parent=1 // pred_fallthru
      _
    %234 = vsyncpa [#allocation3], 1
    %235 = vsyncpa [#allocation6], 1
    %236 = vsyncpa [#allocation4], 1
    %237 = vsyncpa [#allocation10], 1

</llo_original>
